<compile_context>
chip_gen: v5e
topology: v5e:2x2
jax: 0.10.0
libtpu: 0.0.40
codegen_flags: <defaults>
</compile_context>

<pallas_src>
import functools

import jax
import jax.numpy as jnp
import numpy as np
from jax.experimental import pallas as pl
from jax.experimental.pallas import tpu as pltpu


def _soft_ce_kernel(eps, num_classes, ignore_index, valid_hw, reduce_out,
                    logits_ref, target_ref, out_ref):
    """One (batch n, spatial tile s) grid step.

    logits_ref: (1, C, ts, 128)   target_ref: (1, ts, 128) int32
    out_ref:    (1, 1, 128) resident accumulator (reduce_out) or (1, ts, 128).
    """
    x = logits_ref[0].astype(jnp.float32)            # (C, ts, 128), f32 in-register
    t = target_ref[0]                                # (ts, 128), int32
    C, ts, L = x.shape

    # Online logsumexp over the class (leading, non-tile) axis.  Reuse (x - m)
    # so the f32 copy of the block is traversed only once; the max terms
    # cancel algebraically in both nll and smooth.
    m = jnp.max(x, axis=0)                           # (ts, 128)
    xm = x - m[None]                                 # (C, ts, 128)
    log_sumexp = jnp.log(jnp.sum(jnp.exp(xm), axis=0))    # (ts, 128)

    # One-hot gather of the target class: small (C, 1, 128) iota broadcasts
    # inside the compare (no materialised (C, ts, 128) index tensor).
    cls = jax.lax.broadcasted_iota(jnp.int32, (C, 1, L), 0)
    x_t_m = jnp.sum(jnp.where(cls == t[None], xm, 0.0), axis=0)   # (ts, 128)
    sum_xm = jnp.sum(xm, axis=0)                                  # (ts, 128)

    nll = log_sumexp - x_t_m                    # -log p[target]
    smooth = num_classes * log_sumexp - sum_xm  # -sum_c log p[c]
    loss = (1.0 - eps) * nll + (eps / num_classes) * smooth       # (ts, 128)

    keep = None
    if ignore_index is not None:
        keep = t != ignore_index
    if valid_hw is not None:
        # Ragged H*W: explicit lane-position mask (robust even when
        # ignore_index is None and the padded logits lanes hold garbage-free
        # but meaningless zeros).
        r = jax.lax.broadcasted_iota(jnp.int32, (ts, L), 0)
        l = jax.lax.broadcasted_iota(jnp.int32, (ts, L), 1)
        pos = (pl.program_id(1) * ts + r) * L + l
        valid = pos < valid_hw
        keep = valid if keep is None else jnp.logical_and(keep, valid)
    if keep is not None:
        loss = jnp.where(keep, loss, 0.0)

    if reduce_out:
        # In-kernel partial reduction: never write the HW-sized per-position
        # map to HBM for 'mean'/'sum'.  out_ref is a per-batch accumulator
        # resident across the (arbitrary) spatial grid axis.
        partial = jnp.sum(loss, axis=0, keepdims=True)            # (1, 128)

        @pl.when(pl.program_id(1) == 0)
        def _():
            out_ref[0] = partial

        @pl.when(pl.program_id(1) > 0)
        def _():
            out_ref[0] = out_ref[0] + partial
    else:
        out_ref[0] = loss


def _choose_spatial_tiling(HW, C, in_itemsize):
    """Pick (S_pad, ts, vmem_limit_bytes).

    The spatial axis is viewed as (S, 128): 128 lanes per sublane row, tiled by
    `ts` rows per grid step (<= 2048 lanes; 512-1024 lanes already reach ~85%
    of the HBM roofline).  The VMEM budget counts the double-buffered input
    block plus ~6 C*ts*128 f32 in-kernel temporaries so it stays inside the
    default scoped VMEM on every generation (16 MiB v5e, 32 MiB v6e/v7x; v7x
    has only 64 MiB physical).
    """
    S = -(-HW // 128)
    per_ts = C * 128 * (2 * in_itemsize + 6 * 4)       # bytes per sublane row
    budget_cap = (10 << 20) // per_ts                  # fits v5e's 16 MiB default
    lane_cap = 16                                      # 16 * 128 = 2048 lanes
    vmem_limit = None

    if budget_cap < 8:
        # Very wide class axis: keep a full (8,128) spatial tile (sub-8 sublane
        # blocks are not allowed) and raise the scoped-VMEM limit instead.
        # TODO(synk): a class-tiled online-logsumexp variant would be cheaper
        # for C >~ 512; not implemented here.
        budget_cap = 8
        vmem_limit = 48 << 20
    cap = min(budget_cap, lane_cap)

    if S <= cap:
        return S, S, vmem_limit                        # single spatial block

    if HW % 128 == 0:
        # Prefer a multiple-of-8 tile that divides S exactly -> no padding.
        for ts in range(8 * (cap // 8), 7, -8):
            if S % ts == 0:
                return S, ts, vmem_limit
        if S <= budget_cap:
            # No nice divisor but the whole extent still fits the VMEM budget:
            # one larger block beats an HBM-level pad copy of the logits.
            return S, S, vmem_limit

    # Ragged spatial axis: pad up to a multiple of ts rows.
    # TODO(synk): the pad costs one extra HBM copy of the logits; a masked
    # boundary block without padding would avoid it.
    ts = 8 * (cap // 8)
    S_pad = -(-S // ts) * ts
    return S_pad, ts, vmem_limit


def soft_cross_entropy_loss(logits_nchw, target_nhw, smooth_factor=0.05,
                            ignore_index=-100, reduction="mean"):
    """Matches SoftCrossEntropyLoss(reduction, smooth_factor, ignore_index, dim=1)."""
    N, C, H, W = logits_nchw.shape
    assert target_nhw.shape == (N, H, W)
    HW = H * W

    S_pad, ts, vmem_limit = _choose_spatial_tiling(
        HW, C, jnp.dtype(logits_nchw.dtype).itemsize)
    HW_pad = S_pad * 128
    num_s = S_pad // ts

    x = logits_nchw.reshape(N, C, HW)                  # pure view, no relayout
    t = target_nhw.reshape(N, HW).astype(jnp.int32)
    if HW_pad != HW:
        fill = ignore_index if ignore_index is not None else 0
        x = jnp.pad(x, ((0, 0), (0, 0), (0, HW_pad - HW)))
        t = jnp.pad(t, ((0, 0), (0, HW_pad - HW)), constant_values=fill)
    x = x.reshape(N, C, S_pad, 128)                    # lane-dense spatial view
    t = t.reshape(N, S_pad, 128)

    reduce_out = reduction in ("mean", "sum")
    valid_hw = HW if HW_pad != HW else None
    kernel = functools.partial(_soft_ce_kernel, float(smooth_factor), C,
                               ignore_index, valid_hw, reduce_out)

    if reduce_out:
        out_shape = jax.ShapeDtypeStruct((N, 1, 128), jnp.float32)
        out_spec = pl.BlockSpec((1, 1, 128), lambda n, s: (n, 0, 0))
        dim_sem = ("parallel", "arbitrary")            # resident accumulator on s
    else:
        out_shape = jax.ShapeDtypeStruct((N, S_pad, 128), jnp.float32)
        out_spec = pl.BlockSpec((1, ts, 128), lambda n, s: (n, s, 0))
        dim_sem = ("parallel", "parallel")

    cp = dict(dimension_semantics=dim_sem)
    if vmem_limit is not None:
        cp["vmem_limit_bytes"] = vmem_limit

    out = pl.pallas_call(
        kernel,
        out_shape=out_shape,
        grid_spec=pltpu.PrefetchScalarGridSpec(
            num_scalar_prefetch=0,
            grid=(N, num_s),
            in_specs=[
                pl.BlockSpec((1, C, ts, 128), lambda n, s: (n, 0, s, 0)),
                pl.BlockSpec((1, ts, 128), lambda n, s: (n, s, 0)),
            ],
            out_specs=out_spec,
        ),
        compiler_params=pltpu.CompilerParams(**cp),
    )(x, t)

    if reduction == "none":
        # Per-position label-smoothed loss, (N, 1, H, W) like the fairseq path.
        return out.reshape(N, HW_pad)[:, :HW].reshape(N, 1, H, W)

    total = jnp.sum(out)                 # padded / ignored positions are exactly 0
    if reduction == "mean":
        # fairseq semantics (matches the reference module): mean over ALL
        # positions; ignored positions contribute exactly 0 to the numerator.
        return total / (N * HW)
    if reduction == "sum":
        return total
    raise ValueError(f"unsupported reduction: {reduction}")


def _reference(logits_nchw, target_nhw, smooth_factor=0.05, ignore_index=-100,
               reduction="mean"):
    # Plain-JAX reference mirroring the PyTorch code path (dim=1).
    logp = jax.nn.log_softmax(logits_nchw.astype(jnp.float32), axis=1)
    t = target_nhw[:, None, :, :]
    if ignore_index is not None:
        pad = t == ignore_index
        tgt = jnp.where(pad, 0, t)
    else:
        pad = jnp.zeros_like(t, dtype=bool)
        tgt = t
    nll = -jnp.take_along_axis(logp, tgt, axis=1)
    smooth = -jnp.sum(logp, axis=1, keepdims=True)
    nll = jnp.where(pad, 0.0, nll)
    smooth = jnp.where(pad, 0.0, smooth)
    C = logits_nchw.shape[1]
    eps = smooth_factor
    if reduction == "mean":
        return (1.0 - eps) * nll.mean() + (eps / C) * smooth.mean()
    if reduction == "sum":
        return (1.0 - eps) * nll.sum() + (eps / C) * smooth.sum()
    return (1.0 - eps) * nll + (eps / C) * smooth


if __name__ == "__main__":
    key = jax.random.PRNGKey(0)
    k1, k2, k3, k4, k5 = jax.random.split(key, 5)

    # --- main case: N=2, C=4, H=W=16, reduction='mean', ignore_index=-100 ---
    N, C, H, W = 2, 4, 16, 16
    logits = jax.random.normal(k1, (N, C, H, W), dtype=jnp.float32)
    target = jax.random.randint(k2, (N, H, W), 0, C, dtype=jnp.int32)
    ignore_mask = jax.random.bernoulli(k3, 0.1, (N, H, W))
    target = jnp.where(ignore_mask, -100, target)

    loss = jax.block_until_ready(
        soft_cross_entropy_loss(logits, target, 0.05, -100, "mean"))
    ref = jax.block_until_ready(_reference(logits, target, 0.05, -100, "mean"))
    np.testing.assert_allclose(np.asarray(loss), np.asarray(ref),
                               rtol=1e-5, atol=1e-5)

    # --- per-position path (reduction='none') ---
    loss_map = jax.block_until_ready(
        soft_cross_entropy_loss(logits, target, 0.05, -100, "none"))
    ref_map = jax.block_until_ready(_reference(logits, target, 0.05, -100, "none"))
    np.testing.assert_allclose(np.asarray(loss_map), np.asarray(ref_map),
                               rtol=1e-5, atol=1e-5)

    # --- ragged H*W (not a multiple of 128) with ignore_index=None ---
    Hr = Wr = 10
    logits_r = jax.random.normal(k4, (N, C, Hr, Wr), dtype=jnp.float32)
    target_r = jax.random.randint(k5, (N, Hr, Wr), 0, C, dtype=jnp.int32)
    loss_r = jax.block_until_ready(
        soft_cross_entropy_loss(logits_r, target_r, 0.05, None, "mean"))
    ref_r = jax.block_until_ready(_reference(logits_r, target_r, 0.05, None, "mean"))
    np.testing.assert_allclose(np.asarray(loss_r), np.asarray(ref_r),
                               rtol=1e-5, atol=1e-5)

    print("KERNEL_OK")
</pallas_src>

<mosaic_0001>
module attributes {stable_mosaic.version = 11 : i64} {
  func.func @_soft_ce_kernel(%arg0: i32, %arg1: i32, %arg2: memref<1x4x2x128xf32, #tpu.memory_space<vmem>>, %arg3: memref<1x2x128xi32, #tpu.memory_space<vmem>>, %arg4: memref<1x1x128xf32, #tpu.memory_space<vmem>>) attributes {dimension_semantics = [#tpu.dimension_semantics<parallel>, #tpu.dimension_semantics<arbitrary>], iteration_bounds = array<i64: 2, 1>, scalar_prefetch = 0 : i64, scratch_operands = 0 : i64, tpu.core_type = #tpu.core_type<tc>, window_params = [{transform_indices = @transform_0, window_bounds = array<i64: 1, 4, 2, 128>}, {transform_indices = @transform_1, window_bounds = array<i64: 1, 2, 128>}, {transform_indices = @transform_2, window_bounds = array<i64: 1, 1, 128>}]} {
    %c0 = arith.constant 0 : index
    %c0_0 = arith.constant 0 : index
    %c0_1 = arith.constant 0 : index
    %c0_2 = arith.constant 0 : index
    %0 = vector.load %arg2[%c0, %c0_0, %c0_1, %c0_2] : memref<1x4x2x128xf32, #tpu.memory_space<vmem>>, vector<1x4x2x128xf32>
    %1 = vector.shape_cast %0 : vector<1x4x2x128xf32> to vector<4x2x128xf32>
    %c0_3 = arith.constant 0 : index
    %c0_4 = arith.constant 0 : index
    %c0_5 = arith.constant 0 : index
    %2 = vector.load %arg3[%c0_3, %c0_4, %c0_5] : memref<1x2x128xi32, #tpu.memory_space<vmem>>, vector<1x2x128xi32>
    %3 = vector.shape_cast %2 : vector<1x2x128xi32> to vector<2x128xi32>
    %cst = arith.constant dense<0xFF800000> : vector<2x128xf32>
    %4 = vector.multi_reduction <maximumf>, %1, %cst [0] : vector<4x2x128xf32> to vector<2x128xf32>
    %5 = vector.shape_cast %4 : vector<2x128xf32> to vector<1x2x128xf32>
    %6 = vector.broadcast %5 : vector<1x2x128xf32> to vector<4x2x128xf32>
    %7 = arith.subf %1, %6 : vector<4x2x128xf32>
    %8 = math.exp %7 : vector<4x2x128xf32>
    %cst_6 = arith.constant dense<0.000000e+00> : vector<2x128xf32>
    %9 = vector.multi_reduction <add>, %8, %cst_6 [0] : vector<4x2x128xf32> to vector<2x128xf32>
    %10 = math.log %9 : vector<2x128xf32>
    %11 = tpu.iota {dimensions = array<i32: 0>} : vector<4x1x128xi32>
    %12 = vector.shape_cast %3 : vector<2x128xi32> to vector<1x2x128xi32>
    %13 = vector.broadcast %11 : vector<4x1x128xi32> to vector<4x2x128xi32>
    %14 = vector.broadcast %12 : vector<1x2x128xi32> to vector<4x2x128xi32>
    %15 = arith.cmpi eq, %13, %14 : vector<4x2x128xi32>
    %cst_7 = arith.constant 0.000000e+00 : f32
    %16 = vector.broadcast %cst_7 : f32 to vector<4x2x128xf32>
    %17 = arith.select %15, %7, %16 : vector<4x2x128xi1>, vector<4x2x128xf32>
    %cst_8 = arith.constant dense<0.000000e+00> : vector<2x128xf32>
    %18 = vector.multi_reduction <add>, %17, %cst_8 [0] : vector<4x2x128xf32> to vector<2x128xf32>
    %cst_9 = arith.constant dense<0.000000e+00> : vector<2x128xf32>
    %19 = vector.multi_reduction <add>, %7, %cst_9 [0] : vector<4x2x128xf32> to vector<2x128xf32>
    %20 = arith.subf %10, %18 : vector<2x128xf32>
    %cst_10 = arith.constant 4.000000e+00 : f32
    %21 = vector.broadcast %cst_10 : f32 to vector<2x128xf32>
    %22 = arith.mulf %21, %10 : vector<2x128xf32>
    %23 = arith.subf %22, %19 : vector<2x128xf32>
    %cst_11 = arith.constant 0.949999988 : f32
    %24 = vector.broadcast %cst_11 : f32 to vector<2x128xf32>
    %25 = arith.mulf %24, %20 : vector<2x128xf32>
    %cst_12 = arith.constant 1.250000e-02 : f32
    %26 = vector.broadcast %cst_12 : f32 to vector<2x128xf32>
    %27 = arith.mulf %26, %23 : vector<2x128xf32>
    %28 = arith.addf %25, %27 : vector<2x128xf32>
    %c-100_i32 = arith.constant -100 : i32
    %29 = vector.broadcast %c-100_i32 : i32 to vector<2x128xi32>
    %30 = arith.cmpi ne, %3, %29 : vector<2x128xi32>
    %cst_13 = arith.constant 0.000000e+00 : f32
    %31 = vector.broadcast %cst_13 : f32 to vector<2x128xf32>
    %32 = arith.select %30, %28, %31 : vector<2x128xi1>, vector<2x128xf32>
    %cst_14 = arith.constant dense<0.000000e+00> : vector<128xf32>
    %33 = vector.multi_reduction <add>, %32, %cst_14 [0] : vector<2x128xf32> to vector<128xf32>
    %34 = vector.shape_cast %33 : vector<128xf32> to vector<1x128xf32>
    %c0_i32 = arith.constant 0 : i32
    %35 = arith.cmpi eq, %arg1, %c0_i32 : i32
    %36 = arith.extui %35 : i1 to i32
    %c0_i32_15 = arith.constant 0 : i32
    %37 = arith.cmpi ne, %36, %c0_i32_15 : i32
    scf.if %37 {
      %c0_18 = arith.constant 0 : index
      %c0_19 = arith.constant 0 : index
      %c0_20 = arith.constant 0 : index
      %41 = vector.load %arg4[%c0_18, %c0_19, %c0_20] : memref<1x1x128xf32, #tpu.memory_space<vmem>>, vector<1x1x128xf32>
      %42 = vector.shape_cast %41 : vector<1x1x128xf32> to vector<1x128xf32>
      %43 = vector.shape_cast %34 : vector<1x128xf32> to vector<1x1x128xf32>
      tpu.vector_store %arg4[%c0_18, %c0_19, %c0_20], %43 {strides = array<i32>} : memref<1x1x128xf32, #tpu.memory_space<vmem>>, vector<1x1x128xf32>,
    } else {
    }
    %c0_i32_16 = arith.constant 0 : i32
    %38 = arith.cmpi sgt, %arg1, %c0_i32_16 : i32
    %39 = arith.extui %38 : i1 to i32
    %c0_i32_17 = arith.constant 0 : i32
    %40 = arith.cmpi ne, %39, %c0_i32_17 : i32
    scf.if %40 {
      %c0_18 = arith.constant 0 : index
      %c0_19 = arith.constant 0 : index
      %c0_20 = arith.constant 0 : index
      %41 = vector.load %arg4[%c0_18, %c0_19, %c0_20] : memref<1x1x128xf32, #tpu.memory_space<vmem>>, vector<1x1x128xf32>
      %42 = vector.shape_cast %41 : vector<1x1x128xf32> to vector<1x128xf32>
      %43 = arith.addf %42, %34 : vector<1x128xf32>
      %c0_21 = arith.constant 0 : index
      %c0_22 = arith.constant 0 : index
      %c0_23 = arith.constant 0 : index
      %44 = vector.load %arg4[%c0_21, %c0_22, %c0_23] : memref<1x1x128xf32, #tpu.memory_space<vmem>>, vector<1x1x128xf32>
      %45 = vector.shape_cast %44 : vector<1x1x128xf32> to vector<1x128xf32>
      %46 = vector.shape_cast %43 : vector<1x128xf32> to vector<1x1x128xf32>
      tpu.vector_store %arg4[%c0_21, %c0_22, %c0_23], %46 {strides = array<i32>} : memref<1x1x128xf32, #tpu.memory_space<vmem>>, vector<1x1x128xf32>,
    } else {
    }
    return
  }
  func.func @transform_0(%arg0: i32, %arg1: i32) -> (i32, i32, i32, i32) {
    %c0_i32 = arith.constant 0 : i32
    %c0_i32_0 = arith.constant 0 : i32
    %c0_i32_1 = arith.constant 0 : i32
    return %arg0, %c0_i32, %arg1, %c0_i32_0 : i32, i32, i32, i32
  }
  func.func @transform_1(%arg0: i32, %arg1: i32) -> (i32, i32, i32) {
    %c0_i32 = arith.constant 0 : i32
    %c0_i32_0 = arith.constant 0 : i32
    return %arg0, %arg1, %c0_i32 : i32, i32, i32
  }
  func.func @transform_2(%arg0: i32, %arg1: i32) -> (i32, i32, i32) {
    %c0_i32 = arith.constant 0 : i32
    %c0_i32_0 = arith.constant 0 : i32
    %c0_i32_1 = arith.constant 0 : i32
    return %arg0, %c0_i32, %c0_i32_0 : i32, i32, i32
  }
}

</mosaic_0001>

<llo_original>
// kernel: tpu_custom_call.1
$region0: #{tpu_custom_call.1}
  #allocation0 [shape = 'u32[]', space=smem, size = 0x4, offset = 0x4, fixed_abs, tag = 'smem constant byte address 0x4 - core index']
  #allocation1 [shape = 'u32[72,128]{1,0:T(1,128)}', space=vmem, size = 0x9000, scoped, tag = 'internal scratch']
  %s0 = inlined_call_operand.hbm [shape: f32[2,4,2,128], index: 0, kind: input, shape index: {}]
  %s1 = inlined_call_operand.hbm [shape: s32[2,2,128], index: 1, kind: input, shape index: {}]
  %s2 = inlined_call_operand.hbm [shape: f32[2,1,128], index: 2, kind: output, shape index: {}]
  %s3 = sld [smem:[#allocation0]]
  $region57: #{tpu_custom_call.1} parent=0
    _
  %s5 = ssub.s32 1, %s3
  %s6 = scalar_select 0, %s5, %s3
  $region1: #{tpu_custom_call.1} parent=0
    #allocation2 [shape = 'u8[8192]{0}', space=vmem, size = 0x2000, scoped, tag = 'input window, operand 0']
    #allocation3 [shape = 's32[2]{0}', space=sflag, size = 0x8, scoped, tag = 'scoped memory for tpu_custom_call.1']
    #allocation4 [shape = 's32[2]{0}', space=sflag, size = 0x8, scoped, tag = 'scoped memory for tpu_custom_call.1']
    #allocation5 [shape = 'u8[2048]{0}', space=vmem, size = 0x800, scoped, tag = 'input window, operand 1']
    #allocation6 [shape = 's32[2]{0}', space=sflag, size = 0x8, scoped, tag = 'scoped memory for tpu_custom_call.1']
    #allocation7 [shape = 'u8[1024]{0}', space=vmem, size = 0x400, scoped, tag = 'output window, operand 0']
    %7 = vsyncpa [#allocation3], 0
    %s8 = scalar_lea.sflag [#allocation3], 1
    %9 = vsyncpa %s8, 0
    %10 = vsyncpa [#allocation6], 0
    %s11 = scalar_lea.sflag [#allocation6], 1
    %12 = vsyncpa %s11, 0
    %13 = vsyncpa [#allocation4], 0
    %s14 = scalar_lea.sflag [#allocation4], 1
    %15 = vsyncpa %s14, 0
    loop: start=0, step=1, limit=4
    $region2: #{tpu_custom_call.1} parent=1 // loop_pre_header
      _
    $region3: #{tpu_custom_call.1} parent=1 // loop_header
      %s17 = sphi 0, %s21
      %p18 = scmp.ge.s32.totalorder %s17, 4
      %s24 = sphi 0, %s36
      %s25 = sphi 0, %s32
      %s26 = sphi 0, %s24
      %s27 = sphi 0, %s25
      %s28 = sphi 0, %s26
      %s29 = sphi 0, %s27
      %s41 = sphi 0, %s43
      %s44 = sphi 0, %s41
      %s45 = sphi 0, %s44
      %s61 = sphi 0, %s45
      %s69 = sphi 0, %s71
      %s72 = sphi 0, %s69
      %s73 = sphi 0, %s72
      %s89 = sphi 0, %s73
      %s95 = sphi 0, %s97
      %s98 = sphi 0, %s95
      %s99 = sphi 0, %s98
      %s115 = sphi 0, %s99
    $region4: #{tpu_custom_call.1} parent=1 // loop_header_branch
      %20 = sbr.rel (%p18) target = $region8
    $region5: #{tpu_custom_call.1} parent=1 // loop_body
      %s22 = ssub.s32 %s17, 1
      %s23 = ssub.s32 %s17, 2
      %s30 = sadd.s32 1, %s25
      %p31 = scmp.ge.s32.totalorder %s30, 1
      %s32 = scalar_select %p31, 0, %s30
      %s33 = sadd.s32 1, %s24
      %s34 = scalar_select %p31, %s33, %s24
      %p35 = scmp.ge.s32.totalorder %s34, 2
      %s36 = scalar_select %p35, 0, %s34
      %s37 = ssub.s32 %s24, %s36
      %s38 = ssub.s32 %s25, %s32
      %s39 = sor.u32 %s37, %s38
      %p40 = scmp.eq.s32.totalorder %s39, 0
      %s42 = sadd.s32 %s41, 1
      %s43 = scalar_select %p40, %s41, %s42
      %p46 = pneg %p40
      %p47 = scmp.eq.s32.totalorder %s17, 1
      %p48 = por %p46, %p47
      %p49 = scmp.ne.s32.totalorder %s41, %s44
      %p50 = scmp.eq.s32.totalorder %s17, 0
      %p51 = por %p49, %p50
      %p52 = scmp.ne.s32.totalorder %s41, %s44
      %p53 = scmp.eq.s32.totalorder %s22, 1
      %p54 = por %p52, %p53
      %p55 = scmp.ne.s32.totalorder %s44, %s45
      %p56 = scmp.eq.s32.totalorder %s22, 0
      %p57 = por %p55, %p56
      %p58 = scmp.ne.s32.totalorder %s44, %s45
      %p59 = scmp.eq.s32.totalorder %s23, 1
      %p60 = por %p58, %p59
      %p62 = scmp.ne.s32.totalorder %s45, %s61
      %p63 = scmp.eq.s32.totalorder %s23, 0
      %p64 = por %p62, %p63
      %s65 = ssub.s32 %s24, %s36
      %s66 = ssub.s32 %s25, %s32
      %s67 = sor.u32 %s65, %s66
      %p68 = scmp.eq.s32.totalorder %s67, 0
      %s70 = sadd.s32 %s69, 1
      %s71 = scalar_select %p68, %s69, %s70
      %p74 = pneg %p68
      %p75 = scmp.eq.s32.totalorder %s17, 1
      %p76 = por %p74, %p75
      %p77 = scmp.ne.s32.totalorder %s69, %s72
      %p78 = scmp.eq.s32.totalorder %s17, 0
      %p79 = por %p77, %p78
      %p80 = scmp.ne.s32.totalorder %s69, %s72
      %p81 = scmp.eq.s32.totalorder %s22, 1
      %p82 = por %p80, %p81
      %p83 = scmp.ne.s32.totalorder %s72, %s73
      %p84 = scmp.eq.s32.totalorder %s22, 0
      %p85 = por %p83, %p84
      %p86 = scmp.ne.s32.totalorder %s72, %s73
      %p87 = scmp.eq.s32.totalorder %s23, 1
      %p88 = por %p86, %p87
      %p90 = scmp.ne.s32.totalorder %s73, %s89
      %p91 = scmp.eq.s32.totalorder %s23, 0
      %p92 = por %p90, %p91
      %s93 = ssub.s32 %s24, %s36
      %p94 = scmp.eq.s32.totalorder %s93, 0
      %s96 = sadd.s32 %s95, 1
      %s97 = scalar_select %p94, %s95, %s96
      %p100 = pneg %p94
      %p101 = scmp.eq.s32.totalorder %s17, 1
      %p102 = por %p100, %p101
      %p103 = scmp.ne.s32.totalorder %s95, %s98
      %p104 = scmp.eq.s32.totalorder %s17, 0
      %p105 = por %p103, %p104
      %p106 = scmp.ne.s32.totalorder %s95, %s98
      %p107 = scmp.eq.s32.totalorder %s22, 1
      %p108 = por %p106, %p107
      %p109 = scmp.ne.s32.totalorder %s98, %s99
      %p110 = scmp.eq.s32.totalorder %s22, 0
      %p111 = por %p109, %p110
      %p112 = scmp.ne.s32.totalorder %s98, %s99
      %p113 = scmp.eq.s32.totalorder %s23, 1
      %p114 = por %p112, %p113
      %p116 = scmp.ne.s32.totalorder %s99, %s115
      %p117 = scmp.eq.s32.totalorder %s23, 0
      %p118 = por %p116, %p117
      %p119 = scmp.le.s32.totalorder 1, %s17
      %p120 = scmp.lt.s32.totalorder %s17, 3
      %p121 = pnand %p119, %p120
      %p122 = pneg %p121
      // Predicated region
      $region9: #{tpu_custom_call.1} parent=5 // pred_check
        _
      $region10: #{tpu_custom_call.1} parent=5 // pred_check_branch
        %124 = sbr.rel (%p121) target = $region12
      $region11: #{tpu_custom_call.1} parent=5 // pred_region
        %s125 = ssub.s32 %s17, 1
      $region12: #{tpu_custom_call.1} parent=5 // pred_fallthru
        _
      %p126 = scmp.lt.s32.totalorder %s17, 2
      // Predicated region
      $region13: #{tpu_custom_call.1} parent=5 // pred_check
        %p127 = pneg %p126
      $region14: #{tpu_custom_call.1} parent=5 // pred_check_branch
        %129 = sbr.rel (%p127) target = $region16
      $region15: #{tpu_custom_call.1} parent=5 // pred_region
        // Predicated region
        $region17: #{tpu_custom_call.1} parent=15 // pred_check
          %p130 = pneg %p51
        $region18: #{tpu_custom_call.1} parent=15 // pred_check_branch
          %132 = sbr.rel (%p130) target = $region20
        $region19: #{tpu_custom_call.1} parent=15 // pred_region
          %s133 = sand.u32 %s41, 1
          %s134 = scalar_lea.sflag [#allocation3], %s133
          %s135 = sand.u32 %s41, 1
          %s136 = smul.addr %s135, 8
          %s137 = scalar_lea.vmem [#allocation2], %s136
          %139 = vsyncadd %s134, 0
          %s140 = smul.addr %s24, 4
          %s141 = sadd.s32 %s25, %s140
          %s142 = smul.addr %s141, 2
          %s143 = scalar_lea.hbm %s0, %s142
          %s144 = sshll.u32 %s143, 4
          %s145 = int_to_ptr.hbm [resolvable:$true] %s144
          %s146 = sshll.u32 %s137, 4
          %s147 = int_to_ptr.vmem [resolvable:$true] %s146
          %152 = dma.hbm_to_vmem [thread:$0]  %s145, 128, %s147, %s134, 32, 32, 2
        $region20: #{tpu_custom_call.1} parent=15 // pred_fallthru
          _
        // Predicated region
        $region21: #{tpu_custom_call.1} parent=15 // pred_check
          %p153 = pneg %p79
        $region22: #{tpu_custom_call.1} parent=15 // pred_check_branch
          %155 = sbr.rel (%p153) target = $region24
        $region23: #{tpu_custom_call.1} parent=15 // pred_region
          %s156 = sand.u32 %s69, 1
          %s157 = scalar_lea.sflag [#allocation6], %s156
          %s158 = sand.u32 %s69, 1
          %s159 = smul.addr %s158, 2
          %s160 = scalar_lea.vmem [#allocation5], %s159
          %162 = vsyncadd %s157, 0
          %s163 = sadd.s32 %s25, %s24
          %s164 = smul.addr %s163, 2
          %s165 = scalar_lea.hbm %s1, %s164
          %s167 = sshll.u32 %s165, 4
          %s168 = int_to_ptr.hbm [resolvable:$true] %s167
          %s169 = sshll.u32 %s160, 4
          %s170 = int_to_ptr.vmem [resolvable:$true] %s169
          %172 = dma.hbm_to_vmem [thread:$0]  %s168, 32, %s170, %s157
        $region24: #{tpu_custom_call.1} parent=15 // pred_fallthru
          _
      $region16: #{tpu_custom_call.1} parent=5 // pred_fallthru
        _
      %p173 = scmp.le.s32.totalorder 1, %s17
      %p174 = scmp.lt.s32.totalorder %s17, 3
      %p175 = pnand %p173, %p174
      %p176 = pneg %p175
      // Predicated region
      $region25: #{tpu_custom_call.1} parent=5 // pred_check
        _
      $region26: #{tpu_custom_call.1} parent=5 // pred_check_branch
        %178 = sbr.rel (%p175) target = $region28
      $region27: #{tpu_custom_call.1} parent=5 // pred_region
        %s179 = ssub.s32 %s17, 1
        %s180 = sand.u32 %s44, 1
        %s181 = scalar_lea.sflag [#allocation3], %s180
        %s182 = sand.u32 %s44, 1
        %s183 = smul.addr %s182, 8
        %s184 = scalar_lea.vmem [#allocation2], %s183
        // Predicated region
        $region29: #{tpu_custom_call.1} parent=27 // pred_check
          %p185 = pneg %p57
        $region30: #{tpu_custom_call.1} parent=27 // pred_check_branch
          %187 = sbr.rel (%p185) target = $region32
        $region31: #{tpu_custom_call.1} parent=27 // pred_region
          %189 = dma.done %s181, 128
        $region32: #{tpu_custom_call.1} parent=27 // pred_fallthru
          _
        %s190 = sand.u32 %s72, 1
        %s191 = scalar_lea.sflag [#allocation6], %s190
        %s192 = sand.u32 %s72, 1
        %s193 = smul.addr %s192, 2
        %s194 = scalar_lea.vmem [#allocation5], %s193
        // Predicated region
        $region33: #{tpu_custom_call.1} parent=27 // pred_check
          %p195 = pneg %p85
        $region34: #{tpu_custom_call.1} parent=27 // pred_check_branch
          %197 = sbr.rel (%p195) target = $region36
        $region35: #{tpu_custom_call.1} parent=27 // pred_region
          %199 = dma.done %s191, 32
        $region36: #{tpu_custom_call.1} parent=27 // pred_fallthru
          _
        %s200 = sand.u32 %s44, 1
        %s201 = scalar_lea.sflag [#allocation3], %s200
        %s202 = sand.u32 %s44, 1
        %s203 = smul.addr %s202, 8
        %s204 = scalar_lea.vmem [#allocation2], %s203
        %p205 = pneg %p57
        %p206 = pneg %p54
        %s207 = sand.u32 %s72, 1
        %s208 = scalar_lea.sflag [#allocation6], %s207
        %s209 = sand.u32 %s72, 1
        %s210 = smul.addr %s209, 2
        %s211 = scalar_lea.vmem [#allocation5], %s210
        %p212 = pneg %p85
        %p213 = pneg %p82
        %p214 = pneg %p111
        %p215 = pneg %p108
        %s216 = sand.u32 %s98, 1
        %s217 = scalar_lea.sflag [#allocation4], %s216
        %s218 = sand.u32 %s98, 1
        %s219 = scalar_lea.vmem [#allocation7], %s218
        %v220 = vld [vmem:[%s184] sm:$0x3]
        %v221 = vld [vmem:[%s184 + $0x2] sm:$0x3]
        %v222 = vld [vmem:[%s184 + $0x4] sm:$0x3]
        %v223 = vld [vmem:[%s184 + $0x6] sm:$0x3]
        %v224 = vld [vmem:[%s194] sm:$0x3]
        %vm225 = vcmask 1041408
        %v226 = vsel %vm225, %v220, -inf
        %v227 = vsel %vm225, %v221, -inf
        %v228 = vsel %vm225, %v222, -inf
        %v229 = vsel %vm225, %v223, -inf
        %v230 = vmax.f32 %v226, %v227
        %v231 = vmax.f32 %v228, %v229
        %v232 = vmax.f32 %v230, %v231
        %v233 = vsub.f32 %v220, %v232
        %v234 = vsub.f32 %v221, %v232
        %v235 = vsub.f32 %v222, %v232
        %v236 = vsub.f32 %v223, %v232
        %v237 = vmul.f32 %v233, 1.442695
        %v238 = vpow.pop %v237
        %v239 = vmul.f32 %v234, 1.442695
        %v240 = vpow.pop %v239
        %v241 = vmul.f32 %v235, 1.442695
        %v242 = vpow.pop %v241
        %v243 = vmul.f32 %v236, 1.442695
        %v244 = vpow.pop %v243
        %v245 = vsel %vm225, %v238, 0.0
        %v246 = vsel %vm225, %v240, 0.0
        %v247 = vadd.f32 %v245, %v246
        %v248 = vsel %vm225, %v242, 0.0
        %v249 = vadd.f32 %v247, %v248
        %v250 = vsel %vm225, %v244, 0.0
        %v251 = vadd.f32 %v249, %v250
        %v252 = vlog2.pop %v251
        %v253 = vmul.f32 %v252, 0.6931472
        %vm254 = vcmp.eq.s32.totalorder %v224, 0
        %vm255 = vcmp.eq.s32.totalorder %v224, 1
        %vm256 = vcmp.eq.s32.totalorder %v224, 2
        %vm257 = vcmp.eq.s32.totalorder %v224, 3
        %v258 = vsel %vm254, %v233, 0.0
        %v259 = vsel %vm255, %v234, 0.0
        %v260 = vsel %vm256, %v235, 0.0
        %v261 = vsel %vm257, %v236, 0.0
        %v262 = vsel %vm225, %v258, 0.0
        %v263 = vsel %vm225, %v259, 0.0
        %v264 = vadd.f32 %v262, %v263
        %v265 = vsel %vm225, %v260, 0.0
        %v266 = vadd.f32 %v264, %v265
        %v267 = vsel %vm225, %v261, 0.0
        %v268 = vadd.f32 %v266, %v267
        %v269 = vsel %vm225, %v233, 0.0
        %v270 = vsel %vm225, %v234, 0.0
        %v271 = vadd.f32 %v269, %v270
        %v272 = vsel %vm225, %v235, 0.0
        %v273 = vadd.f32 %v271, %v272
        %v274 = vsel %vm225, %v236, 0.0
        %v275 = vadd.f32 %v273, %v274
        %v276 = vsub.f32 %v253, %v268
        %v277 = vmul.f32 %v253, 4.0
        %v278 = vsub.f32 %v277, %v275
        %v279 = vmul.f32 %v276, 0.95
        %v280 = vmul.f32 %v278, 0.0125
        %v281 = vadd.f32 %v279, %v280
        %vm282 = vcmp.ne.s32.totalorder %v224, 4294967196
        %v283 = vsel %vm282, %v281, 0.0
        %v284 = vsel %vm225, %v283, 0.0
        %v285 = vrot.slane %v284, 4
        %v286 = vadd.f32 %v284, %v285
        %v287 = vrot.slane %v286, 2
        %v288 = vadd.f32 %v286, %v287
        %v289 = vrot.slane %v288, 1
        %v290 = vadd.f32 %v288, %v289
        %p291 = scmp.eq.s32.totalorder %s27, 0
        // Predicated region
        $region37: #{tpu_custom_call.1} parent=27 // pred_check
          %p292 = pneg %p291
        $region38: #{tpu_custom_call.1} parent=27 // pred_check_branch
          %294 = sbr.rel (%p292) target = $region40
        $region39: #{tpu_custom_call.1} parent=27 // pred_region
          %295 = vst [vmem:[%s219] sm:$0x1] %v290
        $region40: #{tpu_custom_call.1} parent=27 // pred_fallthru
          _
        %p296 = scmp.gt.s32.totalorder %s27, 0
        // Predicated region
        $region41: #{tpu_custom_call.1} parent=27 // pred_check
          %p297 = pneg %p296
        $region42: #{tpu_custom_call.1} parent=27 // pred_check_branch
          %299 = sbr.rel (%p297) target = $region44
        $region43: #{tpu_custom_call.1} parent=27 // pred_region
          %v300 = vld [vmem:[%s219] sm:$0x1]
          %v301 = vadd.f32 %v300, %v290
          %302 = vst [vmem:[%s219] sm:$0x1] %v301
        $region44: #{tpu_custom_call.1} parent=27 // pred_fallthru
          _
        %s303 = sand.u32 %s98, 1
        %s304 = scalar_lea.sflag [#allocation4], %s303
        %s305 = sand.u32 %s98, 1
        %s306 = scalar_lea.vmem [#allocation7], %s305
        // Predicated region
        $region45: #{tpu_custom_call.1} parent=27 // pred_check
          %p307 = pneg %p108
        $region46: #{tpu_custom_call.1} parent=27 // pred_check_branch
          %309 = sbr.rel (%p307) target = $region48
        $region47: #{tpu_custom_call.1} parent=27 // pred_region
          %311 = vsyncadd %s304, 0
          %s312 = scalar_lea.hbm %s2, %s26
          %s314 = sshll.u32 %s306, 4
          %s315 = int_to_ptr.vmem [resolvable:$true] %s314
          %s316 = sshll.u32 %s312, 4
          %s317 = int_to_ptr.hbm [resolvable:$true] %s316
          %319 = dma.vmem_to_hbm [thread:$0]  %s315, 16, %s317, %s304
        $region48: #{tpu_custom_call.1} parent=27 // pred_fallthru
          _
      $region28: #{tpu_custom_call.1} parent=5 // pred_fallthru
        _
      %p320 = scmp.le.s32.totalorder 2, %s17
      // Predicated region
      $region49: #{tpu_custom_call.1} parent=5 // pred_check
        %p321 = pneg %p320
      $region50: #{tpu_custom_call.1} parent=5 // pred_check_branch
        %323 = sbr.rel (%p321) target = $region52
      $region51: #{tpu_custom_call.1} parent=5 // pred_region
        %s324 = ssub.s32 %s17, 2
        // Predicated region
        $region53: #{tpu_custom_call.1} parent=51 // pred_check
          %p325 = pneg %p114
        $region54: #{tpu_custom_call.1} parent=51 // pred_check_branch
          %327 = sbr.rel (%p325) target = $region56
        $region55: #{tpu_custom_call.1} parent=51 // pred_region
          %s328 = sand.u32 %s99, 1
          %s329 = scalar_lea.sflag [#allocation4], %s328
          %s330 = sand.u32 %s99, 1
          %s331 = scalar_lea.vmem [#allocation7], %s330
          %333 = dma.done %s329, 16
        $region56: #{tpu_custom_call.1} parent=51 // pred_fallthru
          _
      $region52: #{tpu_custom_call.1} parent=5 // pred_fallthru
        _
    $region6: #{tpu_custom_call.1} parent=1 // loop_footer
      %s21 = sadd.s32 1, %s17
    $region7: #{tpu_custom_call.1} parent=1 // loop_footer_branch
      %16 = sbr.rel target = $region3
    $region8: #{tpu_custom_call.1} parent=1 // loop_exit
      _
    %334 = vsyncpa [#allocation3], 1
    %s335 = scalar_lea.sflag [#allocation3], 1
    %336 = vsyncpa %s335, 1
    %337 = vsyncpa [#allocation6], 1
    %s338 = scalar_lea.sflag [#allocation6], 1
    %339 = vsyncpa %s338, 1
    %340 = vsyncpa [#allocation4], 1
    %s341 = scalar_lea.sflag [#allocation4], 1
    %342 = vsyncpa %s341, 1

</llo_original>
